<compile_context>
chip_gen: v7x
topology: tpu7x:2x2x1
jax: 0.10.0
libtpu: 0.0.40
codegen_flags: <defaults>
</compile_context>

<pallas_src>
import jax
import jax.numpy as jnp
from jax.experimental import pallas as pl
from jax.experimental.pallas import tpu as pltpu

HDIM = 768                                # fixed by the PyTorch module's __init__
_ROW_PACK = 16                            # row-tile multiple: covers f32 (8) + bf16/int8 packing
_TARGET_BLOCK_BYTES = 6 * 1024 * 1024     # ~6 MiB per h tile (dtype-aware row count)
_TINY_BYTES = 512 * 1024                  # below this, one full-extent block is fine
_MIN_BLOCKS = 4                           # keep the pipeline + both v7x cores busy
_VMEM_CAP_BYTES = 48 * 1024 * 1024        # headroom under v7x's 64 MiB physical VMEM


def _stable_sigmoid_f32(x):
    # Same piecewise form as jax.nn.sigmoid, built only from ops with
    # guaranteed Mosaic lowerings (exp / div / where); finite for all finite x.
    pos = 1.0 / (1.0 + jnp.exp(-x))
    ex = jnp.exp(x)
    neg = ex / (1.0 + ex)
    return jnp.where(x >= 0.0, pos, neg)


def _gating_kernel(gate_ref, h_ref, o_ref):
    # gate_ref: (1, HDIM) raw gate (f32).  The 768-element sigmoid lands on the
    # EUP slot (free in this HBM-bound kernel).  Multiply in f32, round once at
    # the store (matches PyTorch's f32-gate promotion semantics more closely).
    sigma = _stable_sigmoid_f32(gate_ref[...].astype(jnp.float32))
    o_ref[...] = (sigma * h_ref[...].astype(jnp.float32)).astype(o_ref.dtype)


def _choose_block_rows(rows, hdim, itemsize):
    """Dtype-aware row-tile choice: byte budget + >=4 even blocks when tiled."""
    total_bytes = rows * hdim * itemsize
    if total_bytes <= _TINY_BYTES or rows <= _ROW_PACK:
        return rows, 1                    # tiny slab: single full-extent block
    row_bytes = hdim * itemsize
    budget_rows = max(_ROW_PACK,
                      (_TARGET_BLOCK_BYTES // row_bytes) // _ROW_PACK * _ROW_PACK)
    n_blocks = max(_MIN_BLOCKS, pl.cdiv(rows, budget_rows))
    if n_blocks % 2:
        n_blocks += 1                     # even block count: balanced on v7x's 2 TCs
    block_rows = pl.cdiv(rows, n_blocks)
    block_rows = ((block_rows + _ROW_PACK - 1) // _ROW_PACK) * _ROW_PACK
    block_rows = min(block_rows, budget_rows)
    return block_rows, pl.cdiv(rows, block_rows)


def weight_gating(h, gate):
    """sigmoid(gate) * h ; gate shape (HDIM,), h shape (..., HDIM)."""
    orig_shape = h.shape
    hdim = orig_shape[-1]
    assert hdim == gate.shape[-1]

    rows = 1
    for d in orig_shape[:-1]:
        rows *= d
    h2 = h.reshape(rows, hdim)
    gate2 = gate.reshape(1, hdim).astype(jnp.float32)

    block_rows, n_blocks = _choose_block_rows(rows, hdim, h2.dtype.itemsize)

    # in + out tiles, each double-buffered, plus small gate buffers + headroom.
    block_bytes = block_rows * hdim * h2.dtype.itemsize
    vmem_need = 4 * block_bytes + 2 * 1024 * 1024
    vmem_limit = min(_VMEM_CAP_BYTES, max(vmem_need, 16 * 1024 * 1024))

    out = pl.pallas_call(
        _gating_kernel,
        out_shape=jax.ShapeDtypeStruct((rows, hdim), h.dtype),
        grid=(n_blocks,),
        in_specs=[
            pl.BlockSpec((1, hdim), lambda i: (0, 0)),            # gate (broadcast)
            pl.BlockSpec((block_rows, hdim), lambda i: (i, 0)),   # h tile
        ],
        out_specs=pl.BlockSpec((block_rows, hdim), lambda i: (i, 0)),
        compiler_params=pltpu.CompilerParams(
            dimension_semantics=("parallel",),
            vmem_limit_bytes=vmem_limit,
        ),
        # TODO(synk): expose input_output_aliases={1: 0} for callers that can
        # donate h (in-place gating), and prefer fusing this multiply into the
        # producer/consumer kernel's epilogue to delete the standalone pass.
    )(gate2, h2)

    return out.reshape(orig_shape)


if __name__ == "__main__":
    key = jax.random.PRNGKey(0)
    k_small, k_big, k_bf16 = jax.random.split(key, 3)

    # Deterministic parameter init, matching nn.Parameter(torch.ones(768)).
    gate = jnp.ones((HDIM,), dtype=jnp.float32)

    # Small input consistent with the forward: (batch=2, seq=8, hidden=768)
    # -> tiny single-block fast path.
    h = jax.random.normal(k_small, (2, 8, HDIM), dtype=jnp.float32)
    out = jax.block_until_ready(weight_gating(h, gate))
    ref = jax.nn.sigmoid(gate) * h
    assert out.shape == h.shape
    assert jnp.allclose(out, ref, atol=1e-6), "mismatch (small, single block)"

    # Multi-tile + ragged-last-block path (1100 rows -> 4 blocks of 288).
    h_big = jax.random.normal(k_big, (1100, HDIM), dtype=jnp.float32)
    out_big = jax.block_until_ready(weight_gating(h_big, gate))
    ref_big = jax.nn.sigmoid(gate) * h_big
    assert jnp.allclose(out_big, ref_big, atol=1e-6), "mismatch (ragged multi-block)"

    # Dtype-aware tiling path (bf16 gets a 2x-larger row budget than f32).
    h_bf16 = jax.random.normal(
        k_bf16, (4, 1024, HDIM), dtype=jnp.float32).astype(jnp.bfloat16)
    out_bf16 = jax.block_until_ready(weight_gating(h_bf16, gate))
    ref_bf16 = (jax.nn.sigmoid(gate) * h_bf16.astype(jnp.float32)).astype(jnp.bfloat16)
    assert jnp.allclose(out_bf16.astype(jnp.float32),
                        ref_bf16.astype(jnp.float32), atol=1e-2), "mismatch (bf16)"

    print("KERNEL_OK")
</pallas_src>

<mosaic_0001>
module attributes {stable_mosaic.version = 11 : i64} {
  func.func @_gating_kernel(%arg0: i32, %arg1: memref<1x768xf32, #tpu.memory_space<vmem>>, %arg2: memref<16x768xf32, #tpu.memory_space<vmem>>, %arg3: memref<16x768xf32, #tpu.memory_space<vmem>>) attributes {dimension_semantics = [#tpu.dimension_semantics<parallel>], iteration_bounds = array<i64: 1>, scalar_prefetch = 0 : i64, scratch_operands = 0 : i64, tpu.core_type = #tpu.core_type<tc>, window_params = [{pipeline_mode = #tpu.pipeline_mode<synchronous>, transform_indices = @transform_0, window_bounds = array<i64: 1, 768>}, {transform_indices = @transform_1, window_bounds = array<i64: 16, 768>}, {transform_indices = @transform_2, window_bounds = array<i64: 16, 768>}]} {
    %c0 = arith.constant 0 : index
    %c0_0 = arith.constant 0 : index
    %0 = vector.load %arg1[%c0, %c0_0] : memref<1x768xf32, #tpu.memory_space<vmem>>, vector<1x768xf32>
    %cst = arith.constant 0.000000e+00 : f32
    %1 = vector.broadcast %cst : f32 to vector<1x768xf32>
    %2 = arith.subf %1, %0 : vector<1x768xf32>
    %3 = math.exp %2 : vector<1x768xf32>
    %cst_1 = arith.constant 1.000000e+00 : f32
    %4 = vector.broadcast %cst_1 : f32 to vector<1x768xf32>
    %5 = arith.addf %4, %3 : vector<1x768xf32>
    %cst_2 = arith.constant 1.000000e+00 : f32
    %6 = vector.broadcast %cst_2 : f32 to vector<1x768xf32>
    %7 = arith.divf %6, %5 : vector<1x768xf32>
    %8 = math.exp %0 : vector<1x768xf32>
    %cst_3 = arith.constant 1.000000e+00 : f32
    %9 = vector.broadcast %cst_3 : f32 to vector<1x768xf32>
    %10 = arith.addf %9, %8 : vector<1x768xf32>
    %11 = arith.divf %8, %10 : vector<1x768xf32>
    %cst_4 = arith.constant 0.000000e+00 : f32
    %12 = vector.broadcast %cst_4 : f32 to vector<1x768xf32>
    %13 = arith.cmpf oge, %0, %12 : vector<1x768xf32>
    %14 = arith.select %13, %7, %11 : vector<1x768xi1>, vector<1x768xf32>
    %c0_5 = arith.constant 0 : index
    %c0_6 = arith.constant 0 : index
    %15 = vector.load %arg2[%c0_5, %c0_6] : memref<16x768xf32, #tpu.memory_space<vmem>>, vector<16x768xf32>
    %16 = vector.broadcast %14 : vector<1x768xf32> to vector<16x768xf32>
    %17 = arith.mulf %16, %15 : vector<16x768xf32>
    %c0_7 = arith.constant 0 : index
    %c0_8 = arith.constant 0 : index
    %18 = vector.load %arg3[%c0_7, %c0_8] : memref<16x768xf32, #tpu.memory_space<vmem>>, vector<16x768xf32>
    tpu.vector_store %arg3[%c0_7, %c0_8], %17 {strides = array<i32>} : memref<16x768xf32, #tpu.memory_space<vmem>>, vector<16x768xf32>,
    return
  }
  func.func @transform_0(%arg0: i32) -> (i32, i32) {
    %c0_i32 = arith.constant 0 : i32
    %c0_i32_0 = arith.constant 0 : i32
    %c0_i32_1 = arith.constant 0 : i32
    return %c0_i32, %c0_i32_0 : i32, i32
  }
  func.func @transform_1(%arg0: i32) -> (i32, i32) {
    %c0_i32 = arith.constant 0 : i32
    %c0_i32_0 = arith.constant 0 : i32
    return %arg0, %c0_i32 : i32, i32
  }
  func.func @transform_2(%arg0: i32) -> (i32, i32) {
    %c0_i32 = arith.constant 0 : i32
    %c0_i32_0 = arith.constant 0 : i32
    return %arg0, %c0_i32 : i32, i32
  }
}

</mosaic_0001>

<llo_original>
// kernel: tpu_custom_call.1
$region0: #{tpu_custom_call.1}
  #allocation0 [shape = 'u32[]', space=smem, size = 0x4, offset = 0x4, fixed_abs, tag = 'smem constant byte address 0x4 - core index']
  #allocation1 [shape = 'u32[144,128]{1,0:T(1,128)}', space=vmem, size = 0x12000, scoped, tag = 'internal scratch']
  %s0 = inlined_call_operand.hbm [shape: f32[1,768], index: 0, kind: input, shape index: {}]
  %s1 = inlined_call_operand.hbm [shape: f32[16,768], index: 1, kind: input, shape index: {}]
  %s2 = inlined_call_operand.hbm [shape: f32[16,768], index: 2, kind: output, shape index: {}]
  %s3 = sld [smem:[#allocation0]]
  $region26: #{tpu_custom_call.1} parent=0
    _
  %s5 = ssub.s32 1, %s3
  %s6 = scalar_select 0, %s5, %s3
  $region1: #{tpu_custom_call.1} parent=0
    #allocation2 [shape = 'u8[3072]{0}', space=vmem, size = 0xc00, scoped, tag = 'input window, operand 0, single buffered']
    #allocation3 [shape = 's32[1]{0}', space=sflag, size = 0x4, scoped, tag = 'scoped memory for tpu_custom_call.1']
    #allocation4 [shape = 's32[1]{0}', space=sflag, size = 0x4, scoped, tag = 'scoped memory for tpu_custom_call.1']
    #allocation5 [shape = 'u8[49152]{0}', space=vmem, size = 0xc000, scoped, tag = 'input window, operand 1, single buffered']
    #allocation6 [shape = 's32[1]{0}', space=sflag, size = 0x4, scoped, tag = 'scoped memory for tpu_custom_call.1']
    #allocation7 [shape = 'u8[49152]{0}', space=vmem, size = 0xc000, scoped, tag = 'output window, operand 0, single buffered']
    %7 = vsyncpa [#allocation3], 0
    %8 = vsyncpa [#allocation6], 0
    %9 = vsyncpa [#allocation4], 0
    // Predicated region
    $region2: #{tpu_custom_call.1} parent=1 // pred_check
      _
    $region3: #{tpu_custom_call.1} parent=1 // pred_check_branch
      %11 = sbr.rel (0) target = $region5
    $region4: #{tpu_custom_call.1} parent=1 // pred_region
      %s13 = ssub.s32 96, 96
      %14 = vsyncadd [#allocation3], %s13
      %s16 = sshll.u32 [#allocation2], 4
      %s17 = int_to_ptr.vmem [resolvable:$true] %s16
      %19 = dma.hbm_to_vmem [thread:$0]  %s0, 96, %s17, [#allocation3]
    $region5: #{tpu_custom_call.1} parent=1 // pred_fallthru
      _
    // Predicated region
    $region6: #{tpu_custom_call.1} parent=1 // pred_check
      _
    $region7: #{tpu_custom_call.1} parent=1 // pred_check_branch
      %21 = sbr.rel (0) target = $region9
    $region8: #{tpu_custom_call.1} parent=1 // pred_region
      %s23 = ssub.s32 1536, 1536
      %24 = vsyncadd [#allocation6], %s23
      %s25 = sshll.u32 [#allocation5], 4
      %s26 = int_to_ptr.vmem [resolvable:$true] %s25
      %31 = dma.hbm_to_vmem [thread:$0]  %s1, 1536, %s26, [#allocation6], 768, 768, 48
    $region9: #{tpu_custom_call.1} parent=1 // pred_fallthru
      _
    // Predicated region
    $region10: #{tpu_custom_call.1} parent=1 // pred_check
      _
    $region11: #{tpu_custom_call.1} parent=1 // pred_check_branch
      %33 = sbr.rel (0) target = $region13
    $region12: #{tpu_custom_call.1} parent=1 // pred_region
      %34 = dma.done [#allocation3], 96
    $region13: #{tpu_custom_call.1} parent=1 // pred_fallthru
      _
    // Predicated region
    $region14: #{tpu_custom_call.1} parent=1 // pred_check
      _
    $region15: #{tpu_custom_call.1} parent=1 // pred_check_branch
      %36 = sbr.rel (0) target = $region17
    $region16: #{tpu_custom_call.1} parent=1 // pred_region
      %37 = dma.done [#allocation6], 1536
    $region17: #{tpu_custom_call.1} parent=1 // pred_fallthru
      _
    %v38 = vld [vmem:[#allocation2] sm:$0x3f]
    %v39 = vsub.f32 0.0, %v38
    %v40 = vmul.f32 %v39, 1.442695
    %v41 = vpow.pop %v40
    %v42 = vadd.f32 %v41, 1.0
    %v43 = vrcp.pop %v42
    %v44 = vmul.f32 1.0, %v43
    %v45 = vmul.f32 %v38, 1.442695
    %v46 = vpow.pop %v45
    %v47 = vadd.f32 %v46, 1.0
    %v48 = vrcp.pop %v47
    %v49 = vmul.f32 %v46, %v48
    %vm50 = vcmp.ge.f32.partialorder %v38, 0.0
    %v51 = vsel %vm50, %v44, %v49
    %v52 = vld [vmem:[#allocation5] sm:$0xff]
    %v53 = vld [vmem:[#allocation5 + $0x8] sm:$0xff]
    %v54 = vld [vmem:[#allocation5 + $0x10] sm:$0xff]
    %v55 = vld [vmem:[#allocation5 + $0x18] sm:$0xff]
    %v56 = vld [vmem:[#allocation5 + $0x20] sm:$0xff]
    %v57 = vld [vmem:[#allocation5 + $0x28] sm:$0xff]
    %v58 = vld [vmem:[#allocation5 + $0x30] sm:$0xff]
    %v59 = vld [vmem:[#allocation5 + $0x38] sm:$0xff]
    %v60 = vld [vmem:[#allocation5 + $0x40] sm:$0xff]
    %v61 = vld [vmem:[#allocation5 + $0x48] sm:$0xff]
    %v62 = vld [vmem:[#allocation5 + $0x50] sm:$0xff]
    %v63 = vld [vmem:[#allocation5 + $0x58] sm:$0xff]
    %v65 = vlaneseq
    %v66 = vshrl.u32 %v65, 7
    %v67 = vsub.s32 0, %v66
    %v68 = vrot.slane %v51, %v67
    %v69 = vlaneseq
    %v70 = vshrl.u32 %v69, 7
    %v71 = vsub.s32 1, %v70
    %v72 = vrot.slane %v51, %v71
    %v73 = vlaneseq
    %v74 = vshrl.u32 %v73, 7
    %v75 = vsub.s32 2, %v74
    %v76 = vrot.slane %v51, %v75
    %v77 = vlaneseq
    %v78 = vshrl.u32 %v77, 7
    %v79 = vsub.s32 3, %v78
    %v80 = vrot.slane %v51, %v79
    %v81 = vlaneseq
    %v82 = vshrl.u32 %v81, 7
    %v83 = vsub.s32 4, %v82
    %v84 = vrot.slane %v51, %v83
    %v85 = vlaneseq
    %v86 = vshrl.u32 %v85, 7
    %v87 = vsub.s32 5, %v86
    %v88 = vrot.slane %v51, %v87
    %v95 = vmul.f32 %v68, %v52
    %v96 = vmul.f32 %v72, %v53
    %v97 = vmul.f32 %v76, %v54
    %v98 = vmul.f32 %v80, %v55
    %v99 = vmul.f32 %v84, %v56
    %v100 = vmul.f32 %v88, %v57
    %v101 = vmul.f32 %v68, %v58
    %v102 = vmul.f32 %v72, %v59
    %v103 = vmul.f32 %v76, %v60
    %v104 = vmul.f32 %v80, %v61
    %v105 = vmul.f32 %v84, %v62
    %v106 = vmul.f32 %v88, %v63
    %107 = vst [vmem:[#allocation7] sm:$0xff] %v95
    %108 = vst [vmem:[#allocation7 + $0x8] sm:$0xff] %v96
    %109 = vst [vmem:[#allocation7 + $0x10] sm:$0xff] %v97
    %110 = vst [vmem:[#allocation7 + $0x18] sm:$0xff] %v98
    %111 = vst [vmem:[#allocation7 + $0x20] sm:$0xff] %v99
    %112 = vst [vmem:[#allocation7 + $0x28] sm:$0xff] %v100
    %113 = vst [vmem:[#allocation7 + $0x30] sm:$0xff] %v101
    %114 = vst [vmem:[#allocation7 + $0x38] sm:$0xff] %v102
    %115 = vst [vmem:[#allocation7 + $0x40] sm:$0xff] %v103
    %116 = vst [vmem:[#allocation7 + $0x48] sm:$0xff] %v104
    %117 = vst [vmem:[#allocation7 + $0x50] sm:$0xff] %v105
    %118 = vst [vmem:[#allocation7 + $0x58] sm:$0xff] %v106
    // Predicated region
    $region18: #{tpu_custom_call.1} parent=1 // pred_check
      _
    $region19: #{tpu_custom_call.1} parent=1 // pred_check_branch
      %120 = sbr.rel (0) target = $region21
    $region20: #{tpu_custom_call.1} parent=1 // pred_region
      %s122 = ssub.s32 1536, 1536
      %123 = vsyncadd [#allocation4], %s122
      %s124 = sshll.u32 [#allocation7], 4
      %s125 = int_to_ptr.vmem [resolvable:$true] %s124
      %130 = dma.vmem_to_hbm [thread:$0]  %s125, 1536, %s2, [#allocation4], 768, 768, 48
    $region21: #{tpu_custom_call.1} parent=1 // pred_fallthru
      _
    // Predicated region
    $region22: #{tpu_custom_call.1} parent=1 // pred_check
      _
    $region23: #{tpu_custom_call.1} parent=1 // pred_check_branch
      %132 = sbr.rel (0) target = $region25
    $region24: #{tpu_custom_call.1} parent=1 // pred_region
      %133 = dma.done [#allocation4], 1536
    $region25: #{tpu_custom_call.1} parent=1 // pred_fallthru
      _
    %134 = vsyncpa [#allocation3], 1
    %135 = vsyncpa [#allocation6], 1
    %136 = vsyncpa [#allocation4], 1

</llo_original>
